<compile_context>
chip_gen: v7x
topology: tpu7x:2x2x1
jax: 0.10.0
libtpu: 0.0.40
codegen_flags: <defaults>
</compile_context>

<pallas_src>
import functools

import jax
import jax.numpy as jnp
from jax.experimental import pallas as pl
from jax.experimental.pallas import tpu as pltpu


def _round_up(x, m):
    return ((x + m - 1) // m) * m


def _qnet_kernel(s_ref, a_ref, w1_ref, b1_ref, w2_ref, b2_ref, w3_ref, b3_ref,
                 o_ref, x_ref):
    """One row tile of q = l3(relu(l2(relu(l1(cat[s, a]))))).

    s_ref: (TM, ni) f32, a_ref: (TM, na) f32   activations arrive as f32 and are
                                               cast to the MXU dtype on the VPU here
    w1_ref: (ni+na, H), w2_ref: (H, H)         compute dtype, resident across grid
    b1_ref, b2_ref: (1, H) f32; w3_ref: (1, H) f32; b3_ref: (1, 1) f32
    o_ref: (TM, 1) f32
    x_ref: (TM, ni+na) VMEM scratch in compute dtype (fused torch.cat buffer)
    """
    ni = s_ref.shape[-1]
    cd = w1_ref.dtype
    # Exact f32 matmuls only on the f32 checking path; bf16 stays MXU-native.
    prec = jax.lax.Precision.HIGHEST if cd == jnp.float32 else None

    # Fused torch.cat([state, action], -1): both halves land in one VMEM row
    # block so layer 1 is a single MXU pass over K = ni + na.
    x_ref[:, :ni] = s_ref[...].astype(cd)
    x_ref[:, ni:] = a_ref[...].astype(cd)

    h1 = jnp.dot(x_ref[...], w1_ref[...], preferred_element_type=jnp.float32,
                 precision=prec) + b1_ref[...]
    h1 = jnp.maximum(h1, 0.0)

    h2 = jnp.dot(h1.astype(cd), w2_ref[...], preferred_element_type=jnp.float32,
                 precision=prec) + b2_ref[...]
    h2 = jnp.maximum(h2, 0.0)

    # linear3 (H -> 1): a 1-column MXU matmul wastes nearly all MXU columns;
    # VPU multiply + XLU lane reduction instead.
    q = jnp.sum(h2 * w3_ref[...], axis=-1, keepdims=True) + b3_ref[...]
    o_ref[...] = q.astype(o_ref.dtype)


def prepare_params(params, compute_dtype=jnp.bfloat16):
    """One-time parameter prep hoisted out of the per-step forward call."""
    w1, b1, w2, b2, w3, b3 = params
    H = w1.shape[1]
    return (
        w1.astype(compute_dtype),               # (ni+na, H) — combined, single layer-1 dot
        b1.reshape(1, H).astype(jnp.float32),
        w2.astype(compute_dtype),               # (H, H)
        b2.reshape(1, H).astype(jnp.float32),
        w3.reshape(1, H).astype(jnp.float32),   # VPU epilogue, keep f32
        b3.reshape(1, 1).astype(jnp.float32),
    )


def _vmem_limit_bytes(tm, ni, na, H, w_bytes):
    """Right-sized VMEM limit from actual buffer math (with 2x headroom)."""
    lane = lambda d: _round_up(d, 128)
    sub = lambda r: _round_up(r, 8)
    act = 2 * tm * (lane(ni) + lane(na)) * 4          # double-buffered f32 input tiles
    out = 2 * tm * lane(1) * 4                        # double-buffered output tile
    wts = 2 * (sub(ni + na) * lane(H) * w_bytes       # residents are still double-
               + sub(H) * lane(H) * w_bytes           # buffered by default
               + 3 * sub(1) * lane(H) * 4
               + sub(1) * lane(1) * 4)
    scratch = tm * lane(ni + na) * w_bytes            # fused-concat scratch
    est = act + out + wts + scratch
    return int(min(max(2 * est, 16 << 20), 60 << 20))


@functools.partial(jax.jit, static_argnames=("block_m",))
def soft_q_forward(state, action, prepared, *, block_m=1024):
    """state: (B, S, num_inputs), action: (B, S, num_actions) -> (B, S, 1)."""
    w1, b1, w2, b2, w3, b3 = prepared
    B, S, ni = state.shape
    na = action.shape[-1]
    d_in = ni + na
    H = w1.shape[1]
    M = B * S

    # No wrapper-side cast or pad: the kernel reads f32 rows straight from HBM
    # (half the activation traffic of a materialized bf16 copy) and the ragged
    # last tile is handled by Pallas — padded rows are never written back.
    s2d = state.reshape(M, ni)
    a2d = action.reshape(M, na)

    tm = min(block_m, _round_up(M, 16))
    # Guarantee >=2 grid steps so the "parallel" row axis can shard across
    # v7x's two TensorCores (irrelevant / skipped at tiny demo M).
    if M > 16 and pl.cdiv(M, tm) < 2:
        tm = max(16, _round_up(pl.cdiv(M, 2), 16))
    grid = (pl.cdiv(M, tm),)

    row_spec = lambda d: pl.BlockSpec((tm, d), lambda i: (i, 0))
    resident = lambda p: pl.BlockSpec(p.shape, lambda i: (0, 0))

    out = pl.pallas_call(
        _qnet_kernel,
        out_shape=jax.ShapeDtypeStruct((M, 1), jnp.float32),
        grid=grid,
        in_specs=[
            row_spec(ni),      # state rows   (pipelined per tile)
            row_spec(na),      # action rows  (pipelined per tile)
            resident(w1),      # weights / biases resident across the grid
            resident(b1),
            resident(w2),
            resident(b2),
            resident(w3),
            resident(b3),
        ],
        out_specs=pl.BlockSpec((tm, 1), lambda i: (i, 0)),
        scratch_shapes=[pltpu.VMEM((tm, d_in), w1.dtype)],
        compiler_params=pltpu.CompilerParams(
            dimension_semantics=("parallel",),   # shard row tiles across TCs on v7x
            vmem_limit_bytes=_vmem_limit_bytes(tm, ni, na, H, w1.dtype.itemsize),
        ),
    )(s2d, a2d, w1, b1, w2, b2, w3, b3)

    # TODO(synk): at training-scale M, emit a lane-dense (1, tm) output block per
    # tile (XLU relayout) instead of (tm, 1) to avoid masked vst.msk writebacks.
    return out.reshape(B, S, 1)


def init_params(key, num_inputs, num_actions, hidden_size, init_w=0.003):
    """Deterministic init mirroring nn.Linear defaults + uniform(-init_w, init_w) for layer 3."""
    d_in = num_inputs + num_actions
    k1, k2, k3, k4, k5, k6 = jax.random.split(key, 6)
    lim1 = 1.0 / jnp.sqrt(d_in)
    lim2 = 1.0 / jnp.sqrt(hidden_size)
    w1 = jax.random.uniform(k1, (d_in, hidden_size), jnp.float32, -lim1, lim1)
    b1 = jax.random.uniform(k2, (hidden_size,), jnp.float32, -lim1, lim1)
    w2 = jax.random.uniform(k3, (hidden_size, hidden_size), jnp.float32, -lim2, lim2)
    b2 = jax.random.uniform(k4, (hidden_size,), jnp.float32, -lim2, lim2)
    w3 = jax.random.uniform(k5, (hidden_size, 1), jnp.float32, -init_w, init_w)
    b3 = jax.random.uniform(k6, (1,), jnp.float32, -init_w, init_w)
    return (w1, b1, w2, b2, w3, b3)


def _reference(state, action, params):
    """Pure-JAX reference (matches the PyTorch forward), HIGHEST precision."""
    w1, b1, w2, b2, w3, b3 = params
    hi = jax.lax.Precision.HIGHEST
    x = jnp.concatenate([state, action], axis=2)
    h1 = jax.nn.relu(jnp.dot(x, w1, precision=hi) + b1)
    h2 = jax.nn.relu(jnp.dot(h1, w2, precision=hi) + b2)
    return jnp.dot(h2, w3, precision=hi) + b3


if __name__ == "__main__":
    key = jax.random.PRNGKey(0)
    k_s, k_a, k_p = jax.random.split(key, 3)

    B, S = 2, 8
    num_inputs, num_actions, hidden = 12, 4, 32

    state = jax.random.normal(k_s, (B, S, num_inputs), jnp.float32)
    action = jax.random.normal(k_a, (B, S, num_actions), jnp.float32)
    params = init_params(k_p, num_inputs, num_actions, hidden)

    q_ref = _reference(state, action, params)

    # f32 compute path: exact check of kernel math / fused concat / ragged tiling.
    prepared_f32 = prepare_params(params, compute_dtype=jnp.float32)
    q_f32 = jax.block_until_ready(soft_q_forward(state, action, prepared_f32))
    assert q_f32.shape == (B, S, 1)
    assert jnp.allclose(q_f32, q_ref, atol=1e-5, rtol=1e-5)

    # bf16 matmul path (production configuration): looser tolerance vs f32 ref.
    prepared_bf16 = prepare_params(params, compute_dtype=jnp.bfloat16)
    q_bf16 = jax.block_until_ready(soft_q_forward(state, action, prepared_bf16))
    assert q_bf16.shape == (B, S, 1)
    assert jnp.allclose(q_bf16, q_ref, atol=3e-2, rtol=3e-2)

    print("KERNEL_OK")
</pallas_src>

<mosaic_0001>
module attributes {stable_mosaic.version = 11 : i64} {
  func.func @_qnet_kernel(%arg0: i32, %arg1: memref<16x12xf32, #tpu.memory_space<vmem>>, %arg2: memref<16x4xf32, #tpu.memory_space<vmem>>, %arg3: memref<16x32xf32, #tpu.memory_space<vmem>>, %arg4: memref<1x32xf32, #tpu.memory_space<vmem>>, %arg5: memref<32x32xf32, #tpu.memory_space<vmem>>, %arg6: memref<1x32xf32, #tpu.memory_space<vmem>>, %arg7: memref<1x32xf32, #tpu.memory_space<vmem>>, %arg8: memref<1x1xf32, #tpu.memory_space<vmem>>, %arg9: memref<16x1xf32, #tpu.memory_space<vmem>>, %arg10: memref<16x16xf32, #tpu.memory_space<vmem>>) attributes {dimension_semantics = [#tpu.dimension_semantics<parallel>], iteration_bounds = array<i64: 1>, scalar_prefetch = 0 : i64, scratch_operands = 1 : i64, tpu.core_type = #tpu.core_type<tc>, window_params = [{transform_indices = @transform_0, window_bounds = array<i64: 16, 12>}, {transform_indices = @transform_1, window_bounds = array<i64: 16, 4>}, {pipeline_mode = #tpu.pipeline_mode<synchronous>, transform_indices = @transform_2, window_bounds = array<i64: 16, 32>}, {pipeline_mode = #tpu.pipeline_mode<synchronous>, transform_indices = @transform_3, window_bounds = array<i64: 1, 32>}, {pipeline_mode = #tpu.pipeline_mode<synchronous>, transform_indices = @transform_4, window_bounds = array<i64: 32, 32>}, {pipeline_mode = #tpu.pipeline_mode<synchronous>, transform_indices = @transform_5, window_bounds = array<i64: 1, 32>}, {pipeline_mode = #tpu.pipeline_mode<synchronous>, transform_indices = @transform_6, window_bounds = array<i64: 1, 32>}, {pipeline_mode = #tpu.pipeline_mode<synchronous>, transform_indices = @transform_7, window_bounds = array<i64: 1, 1>}, {transform_indices = @transform_8, window_bounds = array<i64: 16, 1>}]} {
    %c0 = arith.constant 0 : index
    %c0_0 = arith.constant 0 : index
    %0 = vector.load %arg1[%c0, %c0_0] : memref<16x12xf32, #tpu.memory_space<vmem>>, vector<16x12xf32>
    %c0_1 = arith.constant 0 : index
    %c0_2 = arith.constant 0 : index
    %1 = vector.load %arg10[%c0_1, %c0_2] : memref<16x16xf32, #tpu.memory_space<vmem>>, vector<16x12xf32>
    tpu.vector_store %arg10[%c0_1, %c0_2], %0 {strides = array<i32>} : memref<16x16xf32, #tpu.memory_space<vmem>>, vector<16x12xf32>,
    %c0_3 = arith.constant 0 : index
    %c0_4 = arith.constant 0 : index
    %2 = vector.load %arg2[%c0_3, %c0_4] : memref<16x4xf32, #tpu.memory_space<vmem>>, vector<16x4xf32>
    %c0_5 = arith.constant 0 : index
    %c12 = arith.constant 12 : index
    %3 = vector.load %arg10[%c0_5, %c12] : memref<16x16xf32, #tpu.memory_space<vmem>>, vector<16x4xf32>
    tpu.vector_store %arg10[%c0_5, %c12], %2 {strides = array<i32>} : memref<16x16xf32, #tpu.memory_space<vmem>>, vector<16x4xf32>,
    %c0_6 = arith.constant 0 : index
    %c0_7 = arith.constant 0 : index
    %4 = vector.load %arg10[%c0_6, %c0_7] : memref<16x16xf32, #tpu.memory_space<vmem>>, vector<16x16xf32>
    %c0_8 = arith.constant 0 : index
    %c0_9 = arith.constant 0 : index
    %5 = vector.load %arg3[%c0_8, %c0_9] : memref<16x32xf32, #tpu.memory_space<vmem>>, vector<16x32xf32>
    %cst = arith.constant dense<0.000000e+00> : vector<16x32xf32>
    %6 = tpu.matmul %4, %5, %cst {dimension_numbers = #tpu.dot_dimension_numbers<[1], [0], [0], [1], [0, 0, 1, 1], [], []>, precision = #tpu.contract_precision<fp32>} : vector<16x16xf32>, vector<16x32xf32>, vector<16x32xf32> -> vector<16x32xf32>
    %c0_10 = arith.constant 0 : index
    %c0_11 = arith.constant 0 : index
    %7 = vector.load %arg4[%c0_10, %c0_11] : memref<1x32xf32, #tpu.memory_space<vmem>>, vector<1x32xf32>
    %8 = vector.broadcast %7 : vector<1x32xf32> to vector<16x32xf32>
    %9 = arith.addf %6, %8 : vector<16x32xf32>
    %cst_12 = arith.constant 0.000000e+00 : f32
    %10 = vector.broadcast %cst_12 : f32 to vector<16x32xf32>
    %11 = arith.maximumf %9, %10 : vector<16x32xf32>
    %c0_13 = arith.constant 0 : index
    %c0_14 = arith.constant 0 : index
    %12 = vector.load %arg5[%c0_13, %c0_14] : memref<32x32xf32, #tpu.memory_space<vmem>>, vector<32x32xf32>
    %cst_15 = arith.constant dense<0.000000e+00> : vector<16x32xf32>
    %13 = tpu.matmul %11, %12, %cst_15 {dimension_numbers = #tpu.dot_dimension_numbers<[1], [0], [0], [1], [0, 0, 1, 1], [], []>, precision = #tpu.contract_precision<fp32>} : vector<16x32xf32>, vector<32x32xf32>, vector<16x32xf32> -> vector<16x32xf32>
    %c0_16 = arith.constant 0 : index
    %c0_17 = arith.constant 0 : index
    %14 = vector.load %arg6[%c0_16, %c0_17] : memref<1x32xf32, #tpu.memory_space<vmem>>, vector<1x32xf32>
    %15 = vector.broadcast %14 : vector<1x32xf32> to vector<16x32xf32>
    %16 = arith.addf %13, %15 : vector<16x32xf32>
    %cst_18 = arith.constant 0.000000e+00 : f32
    %17 = vector.broadcast %cst_18 : f32 to vector<16x32xf32>
    %18 = arith.maximumf %16, %17 : vector<16x32xf32>
    %c0_19 = arith.constant 0 : index
    %c0_20 = arith.constant 0 : index
    %19 = vector.load %arg7[%c0_19, %c0_20] : memref<1x32xf32, #tpu.memory_space<vmem>>, vector<1x32xf32>
    %20 = vector.broadcast %19 : vector<1x32xf32> to vector<16x32xf32>
    %21 = arith.mulf %18, %20 : vector<16x32xf32>
    %cst_21 = arith.constant dense<0.000000e+00> : vector<16xf32>
    %22 = vector.multi_reduction <add>, %21, %cst_21 [1] : vector<16x32xf32> to vector<16xf32>
    %23 = vector.shape_cast %22 : vector<16xf32> to vector<16x1xf32>
    %c0_22 = arith.constant 0 : index
    %c0_23 = arith.constant 0 : index
    %24 = vector.load %arg8[%c0_22, %c0_23] : memref<1x1xf32, #tpu.memory_space<vmem>>, vector<1x1xf32>
    %25 = vector.broadcast %24 : vector<1x1xf32> to vector<16x1xf32>
    %26 = arith.addf %23, %25 : vector<16x1xf32>
    %c0_24 = arith.constant 0 : index
    %c0_25 = arith.constant 0 : index
    %27 = vector.load %arg9[%c0_24, %c0_25] : memref<16x1xf32, #tpu.memory_space<vmem>>, vector<16x1xf32>
    tpu.vector_store %arg9[%c0_24, %c0_25], %26 {strides = array<i32>} : memref<16x1xf32, #tpu.memory_space<vmem>>, vector<16x1xf32>,
    return
  }
  func.func @transform_0(%arg0: i32) -> (i32, i32) {
    %c0_i32 = arith.constant 0 : i32
    %c0_i32_0 = arith.constant 0 : i32
    return %arg0, %c0_i32 : i32, i32
  }
  func.func @transform_1(%arg0: i32) -> (i32, i32) {
    %c0_i32 = arith.constant 0 : i32
    %c0_i32_0 = arith.constant 0 : i32
    return %arg0, %c0_i32 : i32, i32
  }
  func.func @transform_2(%arg0: i32) -> (i32, i32) {
    %c0_i32 = arith.constant 0 : i32
    %c0_i32_0 = arith.constant 0 : i32
    %c0_i32_1 = arith.constant 0 : i32
    return %c0_i32, %c0_i32_0 : i32, i32
  }
  func.func @transform_3(%arg0: i32) -> (i32, i32) {
    %c0_i32 = arith.constant 0 : i32
    %c0_i32_0 = arith.constant 0 : i32
    %c0_i32_1 = arith.constant 0 : i32
    return %c0_i32, %c0_i32_0 : i32, i32
  }
  func.func @transform_4(%arg0: i32) -> (i32, i32) {
    %c0_i32 = arith.constant 0 : i32
    %c0_i32_0 = arith.constant 0 : i32
    %c0_i32_1 = arith.constant 0 : i32
    return %c0_i32, %c0_i32_0 : i32, i32
  }
  func.func @transform_5(%arg0: i32) -> (i32, i32) {
    %c0_i32 = arith.constant 0 : i32
    %c0_i32_0 = arith.constant 0 : i32
    %c0_i32_1 = arith.constant 0 : i32
    return %c0_i32, %c0_i32_0 : i32, i32
  }
  func.func @transform_6(%arg0: i32) -> (i32, i32) {
    %c0_i32 = arith.constant 0 : i32
    %c0_i32_0 = arith.constant 0 : i32
    %c0_i32_1 = arith.constant 0 : i32
    return %c0_i32, %c0_i32_0 : i32, i32
  }
  func.func @transform_7(%arg0: i32) -> (i32, i32) {
    %c0_i32 = arith.constant 0 : i32
    %c0_i32_0 = arith.constant 0 : i32
    %c0_i32_1 = arith.constant 0 : i32
    return %c0_i32, %c0_i32_0 : i32, i32
  }
  func.func @transform_8(%arg0: i32) -> (i32, i32) {
    %c0_i32 = arith.constant 0 : i32
    %c0_i32_0 = arith.constant 0 : i32
    return %arg0, %c0_i32 : i32, i32
  }
}

</mosaic_0001>

<llo_original>
// kernel: soft_q_forward.1
$region0: #{soft_q_forward.1}
  #allocation0 [shape = 'u32[]', space=smem, size = 0x4, offset = 0x4, fixed_abs, tag = 'smem constant byte address 0x4 - core index']
  #allocation1 [shape = 'u32[144,128]{1,0:T(1,128)}', space=vmem, size = 0x12000, scoped, tag = 'internal scratch']
  #allocation2 [shape = 'f32[16,16]{1,0:T(8,128)}', space=vmem, size = 0x2000, scoped, tag = 'scratch operand']
  #allocation3 [shape = 'f32[1,1]{1,0:T(1,128)S(1)}', space=vmem, size = 0x200, scoped, tag = 'scoped memory for soft_q_forward.1']
  %s0 = inlined_call_operand.vmem [shape: f32[16,12], index: 0, kind: input, shape index: {}]
  %s1 = inlined_call_operand.vmem [shape: f32[16,4], index: 1, kind: input, shape index: {}]
  %s2 = inlined_call_operand.hbm [shape: f32[16,32], index: 2, kind: input, shape index: {}]
  %s3 = inlined_call_operand.vmem [shape: f32[1,32], index: 3, kind: input, shape index: {}]
  %s4 = inlined_call_operand.vmem [shape: f32[32,32], index: 4, kind: input, shape index: {}]
  %s5 = inlined_call_operand.vmem [shape: f32[1,32], index: 5, kind: input, shape index: {}]
  %s6 = inlined_call_operand.vmem [shape: f32[1,32], index: 6, kind: input, shape index: {}]
  %s7 = inlined_call_operand.<no memory space> [shape: f32[1,1], index: 7, kind: input, shape index: {}]
  %s8 = inlined_call_operand.vmem [shape: f32[16,1], index: 8, kind: output, shape index: {}]
  %s9 = sld [smem:[#allocation0]]
  $region46: #{soft_q_forward.1} parent=0
    _
  %s11 = ssub.s32 1, %s9
  %s12 = scalar_select 0, %s11, %s9
  %v13 = vstv %s7
  %14 = vst [vmem:[#allocation3] sm:$0x1] %v13
  $region1: #{soft_q_forward.1} parent=0
    #allocation4 [shape = 'u8[8192]{0}', space=vmem, size = 0x2000, scoped, tag = 'input window, operand 2, single buffered']
    #allocation5 [shape = 's32[1]{0}', space=sflag, size = 0x4, scoped, tag = 'scoped memory for soft_q_forward.1']
    %15 = vsyncpa [#allocation5], 0
    // Predicated region
    $region2: #{soft_q_forward.1} parent=1 // pred_check
      _
    $region3: #{soft_q_forward.1} parent=1 // pred_check_branch
      %17 = sbr.rel (0) target = $region5
    $region4: #{soft_q_forward.1} parent=1 // pred_region
      _
    $region5: #{soft_q_forward.1} parent=1 // pred_fallthru
      _
    // Predicated region
    $region6: #{soft_q_forward.1} parent=1 // pred_check
      _
    $region7: #{soft_q_forward.1} parent=1 // pred_check_branch
      %19 = sbr.rel (0) target = $region9
    $region8: #{soft_q_forward.1} parent=1 // pred_region
      _
    $region9: #{soft_q_forward.1} parent=1 // pred_fallthru
      _
    // Predicated region
    $region10: #{soft_q_forward.1} parent=1 // pred_check
      _
    $region11: #{soft_q_forward.1} parent=1 // pred_check_branch
      %21 = sbr.rel (0) target = $region13
    $region12: #{soft_q_forward.1} parent=1 // pred_region
      %s23 = ssub.s32 256, 256
      %24 = vsyncadd [#allocation5], %s23
      %s25 = sshll.u32 [#allocation4], 4
      %s26 = int_to_ptr.vmem [resolvable:$true] %s25
      %31 = dma.hbm_to_vmem [thread:$0]  %s2, 256, %s26, [#allocation5], 128, 128, 8
    $region13: #{soft_q_forward.1} parent=1 // pred_fallthru
      _
    // Predicated region
    $region14: #{soft_q_forward.1} parent=1 // pred_check
      _
    $region15: #{soft_q_forward.1} parent=1 // pred_check_branch
      %33 = sbr.rel (0) target = $region17
    $region16: #{soft_q_forward.1} parent=1 // pred_region
      _
    $region17: #{soft_q_forward.1} parent=1 // pred_fallthru
      _
    // Predicated region
    $region18: #{soft_q_forward.1} parent=1 // pred_check
      _
    $region19: #{soft_q_forward.1} parent=1 // pred_check_branch
      %35 = sbr.rel (0) target = $region21
    $region20: #{soft_q_forward.1} parent=1 // pred_region
      _
    $region21: #{soft_q_forward.1} parent=1 // pred_fallthru
      _
    // Predicated region
    $region22: #{soft_q_forward.1} parent=1 // pred_check
      _
    $region23: #{soft_q_forward.1} parent=1 // pred_check_branch
      %37 = sbr.rel (0) target = $region25
    $region24: #{soft_q_forward.1} parent=1 // pred_region
      _
    $region25: #{soft_q_forward.1} parent=1 // pred_fallthru
      _
    // Predicated region
    $region26: #{soft_q_forward.1} parent=1 // pred_check
      _
    $region27: #{soft_q_forward.1} parent=1 // pred_check_branch
      %39 = sbr.rel (0) target = $region29
    $region28: #{soft_q_forward.1} parent=1 // pred_region
      _
    $region29: #{soft_q_forward.1} parent=1 // pred_fallthru
      _
    // Predicated region
    $region30: #{soft_q_forward.1} parent=1 // pred_check
      _
    $region31: #{soft_q_forward.1} parent=1 // pred_check_branch
      %41 = sbr.rel (0) target = $region33
    $region32: #{soft_q_forward.1} parent=1 // pred_region
      _
    $region33: #{soft_q_forward.1} parent=1 // pred_fallthru
      _
    // Predicated region
    $region34: #{soft_q_forward.1} parent=1 // pred_check
      _
    $region35: #{soft_q_forward.1} parent=1 // pred_check_branch
      %43 = sbr.rel (0) target = $region37
    $region36: #{soft_q_forward.1} parent=1 // pred_region
      %44 = dma.done [#allocation5], 256
    $region37: #{soft_q_forward.1} parent=1 // pred_fallthru
      _
    %v45 = vld [vmem:[%s0] sm:$0xff]
    %v46 = vld [vmem:[%s0 + $0x8] sm:$0xff]
    %vm47 = vcmask 97280
    %48 = vst.msk [vmem:[#allocation2] sm:$0xff] %vm47, %v45
    %49 = vst.msk [vmem:[#allocation2 + $0x8] sm:$0xff] %vm47, %v46
    %v50 = vld [vmem:[%s1] sm:$0xff]
    %v51 = vld [vmem:[%s1 + $0x8] sm:$0xff]
    %54 = vrot.lane.b32.xlu0 %v50, 12
    %v55 = vpop.permute.xlu0 %54
    %56 = vrot.lane.b32.xlu0 %v51, 12
    %v57 = vpop.permute.xlu0 %56
    %vm60 = vcmask 130144
    %61 = vst.msk [vmem:[#allocation2] sm:$0xff] %vm60, %v55
    %62 = vst.msk [vmem:[#allocation2 + $0x8] sm:$0xff] %vm60, %v57
    %v63 = vld [vmem:[#allocation2] sm:$0xff]
    %v64 = vld [vmem:[#allocation2 + $0x8] sm:$0xff]
    %v65 = vld [vmem:[#allocation4] sm:$0xff]
    %v66 = vld [vmem:[#allocation4 + $0x8] sm:$0xff]
    %v67 = vld [vmem:[%s3] sm:$0x1]
    %v69 = vlaneseq
    %v70 = vshrl.u32 %v69, 7
    %v71 = vsub.s32 0, %v70
    %v72 = vrot.slane %v67, %v71
    %vm74 = vcmask 130048
    %v76 = vsel %vm74, %v63, 0
    %v79 = vsel %vm74, %v64, 0
    %81 = vmatprep.subr.mxu0 0.0
    %v82 = vand.u32 %v65, 4294901760
    %83 = vmatpush1.msra.mxu0 %v82
    %84 = vmatprep.subr.mxu0 0.0
    %v85 = vand.u32 %v66, 4294901760
    %86 = vmatpush1.msra.mxu0 %v85
    %87 = vmatprep.subr.mxu0 0.0
    %88 = vmatpush1.msra.mxu0 0.0
    %89 = vmatprep.subr.mxu0 0.0
    %90 = vmatpush1.msra.mxu0 0.0
    %91 = vmatprep.subr.mxu0 0.0
    %92 = vmatpush1.msra.mxu0 0.0
    %93 = vmatprep.subr.mxu0 0.0
    %94 = vmatpush1.msra.mxu0 0.0
    %95 = vmatprep.subr.mxu0 0.0
    %96 = vmatpush1.msra.mxu0 0.0
    %97 = vmatprep.subr.mxu0 0.0
    %98 = vmatpush1.msra.mxu0 0.0
    %99 = vmatprep.subr.mxu0 0.0
    %100 = vmatpush1.msra.mxu0 0.0
    %101 = vmatprep.subr.mxu0 0.0
    %102 = vmatpush1.msra.mxu0 0.0
    %103 = vmatprep.subr.mxu0 0.0
    %104 = vmatpush1.msra.mxu0 0.0
    %105 = vmatprep.subr.mxu0 0.0
    %106 = vmatpush1.msra.mxu0 0.0
    %107 = vmatprep.subr.mxu0 0.0
    %108 = vmatpush1.msra.mxu0 0.0
    %109 = vmatprep.subr.mxu0 0.0
    %110 = vmatpush1.msra.mxu0 0.0
    %111 = vmatprep.subr.mxu0 0.0
    %112 = vmatpush1.msra.mxu0 0.0
    %113 = vmatprep.subr.mxu0 0.0
    %114 = vmatpush1.msra.mxu0 0.0
    %115 = vmatprep.subr.mxu0 0.0
    %116 = vmatpush1.msra.mxu0 0.0
    %117 = vmatprep.subr.mxu0 0.0
    %118 = vmatpush1.msra.mxu0 0.0
    %119 = vmatprep.subr.mxu0 0.0
    %120 = vmatpush1.msra.mxu0 0.0
    %121 = vmatprep.subr.mxu0 0.0
    %122 = vmatpush1.msra.mxu0 0.0
    %123 = vmatprep.subr.mxu0 0.0
    %124 = vmatpush1.msra.mxu0 0.0
    %125 = vmatprep.subr.mxu0 0.0
    %126 = vmatpush1.msra.mxu0 0.0
    %127 = vmatprep.subr.mxu0 0.0
    %128 = vmatpush1.msra.mxu0 0.0
    %129 = vmatprep.subr.mxu0 0.0
    %130 = vmatpush1.msra.mxu0 0.0
    %131 = vmatprep.subr.mxu0 0.0
    %132 = vmatpush1.msra.mxu0 0.0
    %133 = vmatprep.subr.mxu0 0.0
    %134 = vmatpush1.msra.mxu0 0.0
    %135 = vmatprep.subr.mxu0 0.0
    %136 = vmatpush1.msra.mxu0 0.0
    %137 = vmatprep.subr.mxu0 0.0
    %138 = vmatpush1.msra.mxu0 0.0
    %139 = vmatprep.subr.mxu0 0.0
    %140 = vmatpush1.msra.mxu0 0.0
    %141 = vmatprep.subr.mxu0 0.0
    %142 = vmatpush1.msra.mxu0 0.0
    %143 = vmatprep.subr.mxu0 0.0
    %144 = vmatpush1.msra.mxu0 0.0
    %145 = vmatprep.subr.mxu0 0.0
    %146 = vmatpush1.msra.mxu0 0.0
    %147 = vmatprep.mubr.f32.mxu0 0.0
    %v148 = vand.u32 %v76, 4294901760
    %v149 = vsub.f32 %v76, %v148
    %v150 = vand.u32 %v149, 4294901760
    %v151 = vsub.f32 %v149, %v150
    %v152 = vand.u32 %v151, 4294901760
    %153 = vmatmul.mubr.f32.gmra.mrb[0].mxu0 %v152
    %v154 = vpop.f32.mrb[0].mxu0
    %v155 = vadd.f32 %v72, %v154
    %v156 = vpop.f32.mrb[0].mxu0
    %157 = vmatprep.mubr.f32.mxu0 0.0
    %v158 = vand.u32 %v79, 4294901760
    %v159 = vsub.f32 %v79, %v158
    %v160 = vand.u32 %v159, 4294901760
    %v161 = vsub.f32 %v159, %v160
    %v162 = vand.u32 %v161, 4294901760
    %163 = vmatmul.mubr.f32.gmra.mrb[0].mxu0 %v162
    %v164 = vpop.f32.mrb[0].mxu0
    %v165 = vadd.f32 %v72, %v164
    %v166 = vpop.f32.mrb[0].mxu0
    %167 = vdwg.mxu0
    %168 = vmatprep.subr.mxu0 0.0
    %v169 = vand.u32 %v65, 4294901760
    %v170 = vsub.f32 %v65, %v169
    %v171 = vand.u32 %v170, 4294901760
    %v172 = vsub.f32 %v170, %v171
    %v173 = vand.u32 %v172, 4294901760
    %174 = vmatpush1.msra.mxu0 %v173
    %175 = vmatprep.subr.mxu0 0.0
    %v176 = vand.u32 %v66, 4294901760
    %v177 = vsub.f32 %v66, %v176
    %v178 = vand.u32 %v177, 4294901760
    %v179 = vsub.f32 %v177, %v178
    %v180 = vand.u32 %v179, 4294901760
    %181 = vmatpush1.msra.mxu0 %v180
    %182 = vmatprep.subr.mxu0 0.0
    %183 = vmatpush1.msra.mxu0 0.0
    %184 = vmatprep.subr.mxu0 0.0
    %185 = vmatpush1.msra.mxu0 0.0
    %186 = vmatprep.subr.mxu0 0.0
    %187 = vmatpush1.msra.mxu0 0.0
    %188 = vmatprep.subr.mxu0 0.0
    %189 = vmatpush1.msra.mxu0 0.0
    %190 = vmatprep.subr.mxu0 0.0
    %191 = vmatpush1.msra.mxu0 0.0
    %192 = vmatprep.subr.mxu0 0.0
    %193 = vmatpush1.msra.mxu0 0.0
    %194 = vmatprep.subr.mxu0 0.0
    %195 = vmatpush1.msra.mxu0 0.0
    %196 = vmatprep.subr.mxu0 0.0
    %197 = vmatpush1.msra.mxu0 0.0
    %198 = vmatprep.subr.mxu0 0.0
    %199 = vmatpush1.msra.mxu0 0.0
    %200 = vmatprep.subr.mxu0 0.0
    %201 = vmatpush1.msra.mxu0 0.0
    %202 = vmatprep.subr.mxu0 0.0
    %203 = vmatpush1.msra.mxu0 0.0
    %204 = vmatprep.subr.mxu0 0.0
    %205 = vmatpush1.msra.mxu0 0.0
    %206 = vmatprep.subr.mxu0 0.0
    %207 = vmatpush1.msra.mxu0 0.0
    %208 = vmatprep.subr.mxu0 0.0
    %209 = vmatpush1.msra.mxu0 0.0
    %210 = vmatprep.subr.mxu0 0.0
    %211 = vmatpush1.msra.mxu0 0.0
    %212 = vmatprep.subr.mxu0 0.0
    %213 = vmatpush1.msra.mxu0 0.0
    %214 = vmatprep.subr.mxu0 0.0
    %215 = vmatpush1.msra.mxu0 0.0
    %216 = vmatprep.subr.mxu0 0.0
    %217 = vmatpush1.msra.mxu0 0.0
    %218 = vmatprep.subr.mxu0 0.0
    %219 = vmatpush1.msra.mxu0 0.0
    %220 = vmatprep.subr.mxu0 0.0
    %221 = vmatpush1.msra.mxu0 0.0
    %222 = vmatprep.subr.mxu0 0.0
    %223 = vmatpush1.msra.mxu0 0.0
    %224 = vmatprep.subr.mxu0 0.0
    %225 = vmatpush1.msra.mxu0 0.0
    %226 = vmatprep.subr.mxu0 0.0
    %227 = vmatpush1.msra.mxu0 0.0
    %228 = vmatprep.subr.mxu0 0.0
    %229 = vmatpush1.msra.mxu0 0.0
    %230 = vmatprep.subr.mxu0 0.0
    %231 = vmatpush1.msra.mxu0 0.0
    %232 = vmatprep.subr.mxu0 0.0
    %233 = vmatpush1.msra.mxu0 0.0
    %234 = vmatprep.subr.mxu0 0.0
    %235 = vmatpush1.msra.mxu0 0.0
    %236 = vmatprep.subr.mxu0 0.0
    %237 = vmatpush1.msra.mxu0 0.0
    %238 = vmatprep.subr.mxu0 0.0
    %239 = vmatpush1.msra.mxu0 0.0
    %240 = vmatprep.subr.mxu0 0.0
    %241 = vmatpush1.msra.mxu0 0.0
    %242 = vmatprep.mubr.f32.mxu0 0.0
    %v243 = vand.u32 %v76, 4294901760
    %244 = vmatmul.mubr.f32.gmra.mrb[0].mxu0 %v243
    %v245 = vpop.f32.mrb[0].mxu0
    %v246 = vadd.f32 %v155, %v245
    %v247 = vpop.f32.mrb[0].mxu0
    %248 = vmatprep.mubr.f32.mxu0 0.0
    %v249 = vand.u32 %v79, 4294901760
    %250 = vmatmul.mubr.f32.gmra.mrb[0].mxu0 %v249
    %v251 = vpop.f32.mrb[0].mxu0
    %v252 = vadd.f32 %v165, %v251
    %v253 = vpop.f32.mrb[0].mxu0
    %254 = vdwg.mxu0
    %255 = vmatprep.subr.mxu0 0.0
    %v256 = vand.u32 %v65, 4294901760
    %v257 = vsub.f32 %v65, %v256
    %258 = vmatpush1.msra.mxu0 %v257
    %259 = vmatprep.subr.mxu0 0.0
    %v260 = vand.u32 %v66, 4294901760
    %v261 = vsub.f32 %v66, %v260
    %262 = vmatpush1.msra.mxu0 %v261
    %263 = vmatprep.subr.mxu0 0.0
    %264 = vmatpush1.msra.mxu0 0.0
    %265 = vmatprep.subr.mxu0 0.0
    %266 = vmatpush1.msra.mxu0 0.0
    %267 = vmatprep.subr.mxu0 0.0
    %268 = vmatpush1.msra.mxu0 0.0
    %269 = vmatprep.subr.mxu0 0.0
    %270 = vmatpush1.msra.mxu0 0.0
    %271 = vmatprep.subr.mxu0 0.0
    %272 = vmatpush1.msra.mxu0 0.0
    %273 = vmatprep.subr.mxu0 0.0
    %274 = vmatpush1.msra.mxu0 0.0
    %275 = vmatprep.subr.mxu0 0.0
    %276 = vmatpush1.msra.mxu0 0.0
    %277 = vmatprep.subr.mxu0 0.0
    %278 = vmatpush1.msra.mxu0 0.0
    %279 = vmatprep.subr.mxu0 0.0
    %280 = vmatpush1.msra.mxu0 0.0
    %281 = vmatprep.subr.mxu0 0.0
    %282 = vmatpush1.msra.mxu0 0.0
    %283 = vmatprep.subr.mxu0 0.0
    %284 = vmatpush1.msra.mxu0 0.0
    %285 = vmatprep.subr.mxu0 0.0
    %286 = vmatpush1.msra.mxu0 0.0
    %287 = vmatprep.subr.mxu0 0.0
    %288 = vmatpush1.msra.mxu0 0.0
    %289 = vmatprep.subr.mxu0 0.0
    %290 = vmatpush1.msra.mxu0 0.0
    %291 = vmatprep.subr.mxu0 0.0
    %292 = vmatpush1.msra.mxu0 0.0
    %293 = vmatprep.subr.mxu0 0.0
    %294 = vmatpush1.msra.mxu0 0.0
    %295 = vmatprep.subr.mxu0 0.0
    %296 = vmatpush1.msra.mxu0 0.0
    %297 = vmatprep.subr.mxu0 0.0
    %298 = vmatpush1.msra.mxu0 0.0
    %299 = vmatprep.subr.mxu0 0.0
    %300 = vmatpush1.msra.mxu0 0.0
    %301 = vmatprep.subr.mxu0 0.0
    %302 = vmatpush1.msra.mxu0 0.0
    %303 = vmatprep.subr.mxu0 0.0
    %304 = vmatpush1.msra.mxu0 0.0
    %305 = vmatprep.subr.mxu0 0.0
    %306 = vmatpush1.msra.mxu0 0.0
    %307 = vmatprep.subr.mxu0 0.0
    %308 = vmatpush1.msra.mxu0 0.0
    %309 = vmatprep.subr.mxu0 0.0
    %310 = vmatpush1.msra.mxu0 0.0
    %311 = vmatprep.subr.mxu0 0.0
    %312 = vmatpush1.msra.mxu0 0.0
    %313 = vmatprep.subr.mxu0 0.0
    %314 = vmatpush1.msra.mxu0 0.0
    %315 = vmatprep.subr.mxu0 0.0
    %316 = vmatpush1.msra.mxu0 0.0
    %317 = vmatprep.subr.mxu0 0.0
    %318 = vmatpush1.msra.mxu0 0.0
    %319 = vmatprep.subr.mxu0 0.0
    %320 = vmatpush1.msra.mxu0 0.0
    %321 = vmatprep.subr.mxu0 0.0
    %322 = vmatpush1.msra.mxu0 0.0
    %323 = vmatprep.mubr.f32.mxu0 0.0
    %v324 = vand.u32 %v76, 4294901760
    %v325 = vsub.f32 %v76, %v324
    %326 = vmatmul.mubr.f32.gmra.mrb[0].mxu0 %v325
    %v327 = vpop.f32.mrb[0].mxu0
    %v328 = vadd.f32 %v246, %v327
    %v329 = vpop.f32.mrb[0].mxu0
    %330 = vmatprep.mubr.f32.mxu0 0.0
    %v331 = vand.u32 %v79, 4294901760
    %v332 = vsub.f32 %v79, %v331
    %333 = vmatmul.mubr.f32.gmra.mrb[0].mxu0 %v332
    %v334 = vpop.f32.mrb[0].mxu0
    %v335 = vadd.f32 %v252, %v334
    %v336 = vpop.f32.mrb[0].mxu0
    %337 = vdwg.mxu0
    %338 = vmatprep.subr.mxu0 0.0
    %v339 = vand.u32 %v65, 4294901760
    %340 = vmatpush1.msra.mxu0 %v339
    %341 = vmatprep.subr.mxu0 0.0
    %v342 = vand.u32 %v66, 4294901760
    %343 = vmatpush1.msra.mxu0 %v342
    %344 = vmatprep.subr.mxu0 0.0
    %345 = vmatpush1.msra.mxu0 0.0
    %346 = vmatprep.subr.mxu0 0.0
    %347 = vmatpush1.msra.mxu0 0.0
    %348 = vmatprep.subr.mxu0 0.0
    %349 = vmatpush1.msra.mxu0 0.0
    %350 = vmatprep.subr.mxu0 0.0
    %351 = vmatpush1.msra.mxu0 0.0
    %352 = vmatprep.subr.mxu0 0.0
    %353 = vmatpush1.msra.mxu0 0.0
    %354 = vmatprep.subr.mxu0 0.0
    %355 = vmatpush1.msra.mxu0 0.0
    %356 = vmatprep.subr.mxu0 0.0
    %357 = vmatpush1.msra.mxu0 0.0
    %358 = vmatprep.subr.mxu0 0.0
    %359 = vmatpush1.msra.mxu0 0.0
    %360 = vmatprep.subr.mxu0 0.0
    %361 = vmatpush1.msra.mxu0 0.0
    %362 = vmatprep.subr.mxu0 0.0
    %363 = vmatpush1.msra.mxu0 0.0
    %364 = vmatprep.subr.mxu0 0.0
    %365 = vmatpush1.msra.mxu0 0.0
    %366 = vmatprep.subr.mxu0 0.0
    %367 = vmatpush1.msra.mxu0 0.0
    %368 = vmatprep.subr.mxu0 0.0
    %369 = vmatpush1.msra.mxu0 0.0
    %370 = vmatprep.subr.mxu0 0.0
    %371 = vmatpush1.msra.mxu0 0.0
    %372 = vmatprep.subr.mxu0 0.0
    %373 = vmatpush1.msra.mxu0 0.0
    %374 = vmatprep.subr.mxu0 0.0
    %375 = vmatpush1.msra.mxu0 0.0
    %376 = vmatprep.subr.mxu0 0.0
    %377 = vmatpush1.msra.mxu0 0.0
    %378 = vmatprep.subr.mxu0 0.0
    %379 = vmatpush1.msra.mxu0 0.0
    %380 = vmatprep.subr.mxu0 0.0
    %381 = vmatpush1.msra.mxu0 0.0
    %382 = vmatprep.subr.mxu0 0.0
    %383 = vmatpush1.msra.mxu0 0.0
    %384 = vmatprep.subr.mxu0 0.0
    %385 = vmatpush1.msra.mxu0 0.0
    %386 = vmatprep.subr.mxu0 0.0
    %387 = vmatpush1.msra.mxu0 0.0
    %388 = vmatprep.subr.mxu0 0.0
    %389 = vmatpush1.msra.mxu0 0.0
    %390 = vmatprep.subr.mxu0 0.0
    %391 = vmatpush1.msra.mxu0 0.0
    %392 = vmatprep.subr.mxu0 0.0
    %393 = vmatpush1.msra.mxu0 0.0
    %394 = vmatprep.subr.mxu0 0.0
    %395 = vmatpush1.msra.mxu0 0.0
    %396 = vmatprep.subr.mxu0 0.0
    %397 = vmatpush1.msra.mxu0 0.0
    %398 = vmatprep.subr.mxu0 0.0
    %399 = vmatpush1.msra.mxu0 0.0
    %400 = vmatprep.subr.mxu0 0.0
    %401 = vmatpush1.msra.mxu0 0.0
    %402 = vmatprep.subr.mxu0 0.0
    %403 = vmatpush1.msra.mxu0 0.0
    %404 = vmatprep.mubr.f32.mxu0 0.0
    %v405 = vand.u32 %v76, 4294901760
    %v406 = vsub.f32 %v76, %v405
    %v407 = vand.u32 %v406, 4294901760
    %408 = vmatmul.mubr.f32.gmra.mrb[0].mxu0 %v407
    %v409 = vpop.f32.mrb[0].mxu0
    %v410 = vadd.f32 %v328, %v409
    %v411 = vpop.f32.mrb[0].mxu0
    %412 = vmatprep.mubr.f32.mxu0 0.0
    %v413 = vand.u32 %v79, 4294901760
    %v414 = vsub.f32 %v79, %v413
    %v415 = vand.u32 %v414, 4294901760
    %416 = vmatmul.mubr.f32.gmra.mrb[0].mxu0 %v415
    %v417 = vpop.f32.mrb[0].mxu0
    %v418 = vadd.f32 %v335, %v417
    %v419 = vpop.f32.mrb[0].mxu0
    %420 = vdwg.mxu0
    %421 = vmatprep.subr.mxu0 0.0
    %v422 = vand.u32 %v65, 4294901760
    %v423 = vsub.f32 %v65, %v422
    %v424 = vand.u32 %v423, 4294901760
    %425 = vmatpush1.msra.mxu0 %v424
    %426 = vmatprep.subr.mxu0 0.0
    %v427 = vand.u32 %v66, 4294901760
    %v428 = vsub.f32 %v66, %v427
    %v429 = vand.u32 %v428, 4294901760
    %430 = vmatpush1.msra.mxu0 %v429
    %431 = vmatprep.subr.mxu0 0.0
    %432 = vmatpush1.msra.mxu0 0.0
    %433 = vmatprep.subr.mxu0 0.0
    %434 = vmatpush1.msra.mxu0 0.0
    %435 = vmatprep.subr.mxu0 0.0
    %436 = vmatpush1.msra.mxu0 0.0
    %437 = vmatprep.subr.mxu0 0.0
    %438 = vmatpush1.msra.mxu0 0.0
    %439 = vmatprep.subr.mxu0 0.0
    %440 = vmatpush1.msra.mxu0 0.0
    %441 = vmatprep.subr.mxu0 0.0
    %442 = vmatpush1.msra.mxu0 0.0
    %443 = vmatprep.subr.mxu0 0.0
    %444 = vmatpush1.msra.mxu0 0.0
    %445 = vmatprep.subr.mxu0 0.0
    %446 = vmatpush1.msra.mxu0 0.0
    %447 = vmatprep.subr.mxu0 0.0
    %448 = vmatpush1.msra.mxu0 0.0
    %449 = vmatprep.subr.mxu0 0.0
    %450 = vmatpush1.msra.mxu0 0.0
    %451 = vmatprep.subr.mxu0 0.0
    %452 = vmatpush1.msra.mxu0 0.0
    %453 = vmatprep.subr.mxu0 0.0
    %454 = vmatpush1.msra.mxu0 0.0
    %455 = vmatprep.subr.mxu0 0.0
    %456 = vmatpush1.msra.mxu0 0.0
    %457 = vmatprep.subr.mxu0 0.0
    %458 = vmatpush1.msra.mxu0 0.0
    %459 = vmatprep.subr.mxu0 0.0
    %460 = vmatpush1.msra.mxu0 0.0
    %461 = vmatprep.subr.mxu0 0.0
    %462 = vmatpush1.msra.mxu0 0.0
    %463 = vmatprep.subr.mxu0 0.0
    %464 = vmatpush1.msra.mxu0 0.0
    %465 = vmatprep.subr.mxu0 0.0
    %466 = vmatpush1.msra.mxu0 0.0
    %467 = vmatprep.subr.mxu0 0.0
    %468 = vmatpush1.msra.mxu0 0.0
    %469 = vmatprep.subr.mxu0 0.0
    %470 = vmatpush1.msra.mxu0 0.0
    %471 = vmatprep.subr.mxu0 0.0
    %472 = vmatpush1.msra.mxu0 0.0
    %473 = vmatprep.subr.mxu0 0.0
    %474 = vmatpush1.msra.mxu0 0.0
    %475 = vmatprep.subr.mxu0 0.0
    %476 = vmatpush1.msra.mxu0 0.0
    %477 = vmatprep.subr.mxu0 0.0
    %478 = vmatpush1.msra.mxu0 0.0
    %479 = vmatprep.subr.mxu0 0.0
    %480 = vmatpush1.msra.mxu0 0.0
    %481 = vmatprep.subr.mxu0 0.0
    %482 = vmatpush1.msra.mxu0 0.0
    %483 = vmatprep.subr.mxu0 0.0
    %484 = vmatpush1.msra.mxu0 0.0
    %485 = vmatprep.subr.mxu0 0.0
    %486 = vmatpush1.msra.mxu0 0.0
    %487 = vmatprep.subr.mxu0 0.0
    %488 = vmatpush1.msra.mxu0 0.0
    %489 = vmatprep.subr.mxu0 0.0
    %490 = vmatpush1.msra.mxu0 0.0
    %491 = vmatprep.mubr.f32.mxu0 0.0
    %v492 = vand.u32 %v76, 4294901760
    %493 = vmatmul.mubr.f32.gmra.mrb[0].mxu0 %v492
    %v494 = vpop.f32.mrb[0].mxu0
    %v495 = vadd.f32 %v410, %v494
    %v496 = vpop.f32.mrb[0].mxu0
    %497 = vmatprep.mubr.f32.mxu0 0.0
    %v498 = vand.u32 %v79, 4294901760
    %499 = vmatmul.mubr.f32.gmra.mrb[0].mxu0 %v498
    %v500 = vpop.f32.mrb[0].mxu0
    %v501 = vadd.f32 %v418, %v500
    %v502 = vpop.f32.mrb[0].mxu0
    %503 = vdwg.mxu0
    %504 = vmatprep.subr.mxu0 0.0
    %v505 = vand.u32 %v65, 4294901760
    %506 = vmatpush1.msra.mxu0 %v505
    %507 = vmatprep.subr.mxu0 0.0
    %v508 = vand.u32 %v66, 4294901760
    %509 = vmatpush1.msra.mxu0 %v508
    %510 = vmatprep.subr.mxu0 0.0
    %511 = vmatpush1.msra.mxu0 0.0
    %512 = vmatprep.subr.mxu0 0.0
    %513 = vmatpush1.msra.mxu0 0.0
    %514 = vmatprep.subr.mxu0 0.0
    %515 = vmatpush1.msra.mxu0 0.0
    %516 = vmatprep.subr.mxu0 0.0
    %517 = vmatpush1.msra.mxu0 0.0
    %518 = vmatprep.subr.mxu0 0.0
    %519 = vmatpush1.msra.mxu0 0.0
    %520 = vmatprep.subr.mxu0 0.0
    %521 = vmatpush1.msra.mxu0 0.0
    %522 = vmatprep.subr.mxu0 0.0
    %523 = vmatpush1.msra.mxu0 0.0
    %524 = vmatprep.subr.mxu0 0.0
    %525 = vmatpush1.msra.mxu0 0.0
    %526 = vmatprep.subr.mxu0 0.0
    %527 = vmatpush1.msra.mxu0 0.0
    %528 = vmatprep.subr.mxu0 0.0
    %529 = vmatpush1.msra.mxu0 0.0
    %530 = vmatprep.subr.mxu0 0.0
    %531 = vmatpush1.msra.mxu0 0.0
    %532 = vmatprep.subr.mxu0 0.0
    %533 = vmatpush1.msra.mxu0 0.0
    %534 = vmatprep.subr.mxu0 0.0
    %535 = vmatpush1.msra.mxu0 0.0
    %536 = vmatprep.subr.mxu0 0.0
    %537 = vmatpush1.msra.mxu0 0.0
    %538 = vmatprep.subr.mxu0 0.0
    %539 = vmatpush1.msra.mxu0 0.0
    %540 = vmatprep.subr.mxu0 0.0
    %541 = vmatpush1.msra.mxu0 0.0
    %542 = vmatprep.subr.mxu0 0.0
    %543 = vmatpush1.msra.mxu0 0.0
    %544 = vmatprep.subr.mxu0 0.0
    %545 = vmatpush1.msra.mxu0 0.0
    %546 = vmatprep.subr.mxu0 0.0
    %547 = vmatpush1.msra.mxu0 0.0
    %548 = vmatprep.subr.mxu0 0.0
    %549 = vmatpush1.msra.mxu0 0.0
    %550 = vmatprep.subr.mxu0 0.0
    %551 = vmatpush1.msra.mxu0 0.0
    %552 = vmatprep.subr.mxu0 0.0
    %553 = vmatpush1.msra.mxu0 0.0
    %554 = vmatprep.subr.mxu0 0.0
    %555 = vmatpush1.msra.mxu0 0.0
    %556 = vmatprep.subr.mxu0 0.0
    %557 = vmatpush1.msra.mxu0 0.0
    %558 = vmatprep.subr.mxu0 0.0
    %559 = vmatpush1.msra.mxu0 0.0
    %560 = vmatprep.subr.mxu0 0.0
    %561 = vmatpush1.msra.mxu0 0.0
    %562 = vmatprep.subr.mxu0 0.0
    %563 = vmatpush1.msra.mxu0 0.0
    %564 = vmatprep.subr.mxu0 0.0
    %565 = vmatpush1.msra.mxu0 0.0
    %566 = vmatprep.subr.mxu0 0.0
    %567 = vmatpush1.msra.mxu0 0.0
    %568 = vmatprep.subr.mxu0 0.0
    %569 = vmatpush1.msra.mxu0 0.0
    %570 = vmatprep.mubr.f32.mxu0 0.0
    %v571 = vand.u32 %v76, 4294901760
    %572 = vmatmul.mubr.f32.gmra.mrb[0].mxu0 %v571
    %v573 = vpop.f32.mrb[0].mxu0
    %v574 = vadd.f32 %v495, %v573
    %v575 = vpop.f32.mrb[0].mxu0
    %576 = vmatprep.mubr.f32.mxu0 0.0
    %v577 = vand.u32 %v79, 4294901760
    %578 = vmatmul.mubr.f32.gmra.mrb[0].mxu0 %v577
    %v579 = vpop.f32.mrb[0].mxu0
    %v580 = vadd.f32 %v501, %v579
    %v581 = vpop.f32.mrb[0].mxu0
    %582 = vdwg.mxu0
    %v583 = vmax.f32 %v574, 0.0
    %v584 = vmax.f32 %v580, 0.0
    %v585 = vld [vmem:[%s4] sm:$0xff]
    %v586 = vld [vmem:[%s4 + $0x8] sm:$0xff]
    %v587 = vld [vmem:[%s4 + $0x10] sm:$0xff]
    %v588 = vld [vmem:[%s4 + $0x18] sm:$0xff]
    %v589 = vld [vmem:[%s5] sm:$0x1]
    %v591 = vlaneseq
    %v592 = vshrl.u32 %v591, 7
    %v593 = vsub.s32 0, %v592
    %v594 = vrot.slane %v589, %v593
    %vm596 = vcmask 261120
    %v598 = vsel %vm596, %v583, 0
    %v601 = vsel %vm596, %v584, 0
    %603 = vmatprep.subr.mxu0 0.0
    %v604 = vand.u32 %v585, 4294901760
    %605 = vmatpush1.msra.mxu0 %v604
    %606 = vmatprep.subr.mxu0 0.0
    %v607 = vand.u32 %v586, 4294901760
    %608 = vmatpush1.msra.mxu0 %v607
    %609 = vmatprep.subr.mxu0 0.0
    %v610 = vand.u32 %v587, 4294901760
    %611 = vmatpush1.msra.mxu0 %v610
    %612 = vmatprep.subr.mxu0 0.0
    %v613 = vand.u32 %v588, 4294901760
    %614 = vmatpush1.msra.mxu0 %v613
    %615 = vmatprep.subr.mxu0 0.0
    %616 = vmatpush1.msra.mxu0 0.0
    %617 = vmatprep.subr.mxu0 0.0
    %618 = vmatpush1.msra.mxu0 0.0
    %619 = vmatprep.subr.mxu0 0.0
    %620 = vmatpush1.msra.mxu0 0.0
    %621 = vmatprep.subr.mxu0 0.0
    %622 = vmatpush1.msra.mxu0 0.0
    %623 = vmatprep.subr.mxu0 0.0
    %624 = vmatpush1.msra.mxu0 0.0
    %625 = vmatprep.subr.mxu0 0.0
    %626 = vmatpush1.msra.mxu0 0.0
    %627 = vmatprep.subr.mxu0 0.0
    %628 = vmatpush1.msra.mxu0 0.0
    %629 = vmatprep.subr.mxu0 0.0
    %630 = vmatpush1.msra.mxu0 0.0
    %631 = vmatprep.subr.mxu0 0.0
    %632 = vmatpush1.msra.mxu0 0.0
    %633 = vmatprep.subr.mxu0 0.0
    %634 = vmatpush1.msra.mxu0 0.0
    %635 = vmatprep.subr.mxu0 0.0
    %636 = vmatpush1.msra.mxu0 0.0
    %637 = vmatprep.subr.mxu0 0.0
    %638 = vmatpush1.msra.mxu0 0.0
    %639 = vmatprep.subr.mxu0 0.0
    %640 = vmatpush1.msra.mxu0 0.0
    %641 = vmatprep.subr.mxu0 0.0
    %642 = vmatpush1.msra.mxu0 0.0
    %643 = vmatprep.subr.mxu0 0.0
    %644 = vmatpush1.msra.mxu0 0.0
    %645 = vmatprep.subr.mxu0 0.0
    %646 = vmatpush1.msra.mxu0 0.0
    %647 = vmatprep.subr.mxu0 0.0
    %648 = vmatpush1.msra.mxu0 0.0
    %649 = vmatprep.subr.mxu0 0.0
    %650 = vmatpush1.msra.mxu0 0.0
    %651 = vmatprep.subr.mxu0 0.0
    %652 = vmatpush1.msra.mxu0 0.0
    %653 = vmatprep.subr.mxu0 0.0
    %654 = vmatpush1.msra.mxu0 0.0
    %655 = vmatprep.subr.mxu0 0.0
    %656 = vmatpush1.msra.mxu0 0.0
    %657 = vmatprep.subr.mxu0 0.0
    %658 = vmatpush1.msra.mxu0 0.0
    %659 = vmatprep.subr.mxu0 0.0
    %660 = vmatpush1.msra.mxu0 0.0
    %661 = vmatprep.subr.mxu0 0.0
    %662 = vmatpush1.msra.mxu0 0.0
    %663 = vmatprep.subr.mxu0 0.0
    %664 = vmatpush1.msra.mxu0 0.0
    %665 = vmatprep.subr.mxu0 0.0
    %666 = vmatpush1.msra.mxu0 0.0
    %667 = vmatprep.subr.mxu0 0.0
    %668 = vmatpush1.msra.mxu0 0.0
    %669 = vmatprep.subr.mxu0 0.0
    %670 = vmatpush1.msra.mxu0 0.0
    %671 = vmatprep.mubr.f32.mxu0 0.0
    %v672 = vand.u32 %v598, 4294901760
    %v673 = vsub.f32 %v598, %v672
    %v674 = vand.u32 %v673, 4294901760
    %v675 = vsub.f32 %v673, %v674
    %v676 = vand.u32 %v675, 4294901760
    %677 = vmatmul.mubr.f32.gmra.mrb[0].mxu0 %v676
    %v678 = vpop.f32.mrb[0].mxu0
    %v679 = vadd.f32 %v594, %v678
    %v680 = vpop.f32.mrb[0].mxu0
    %681 = vmatprep.mubr.f32.mxu0 0.0
    %v682 = vand.u32 %v601, 4294901760
    %v683 = vsub.f32 %v601, %v682
    %v684 = vand.u32 %v683, 4294901760
    %v685 = vsub.f32 %v683, %v684
    %v686 = vand.u32 %v685, 4294901760
    %687 = vmatmul.mubr.f32.gmra.mrb[0].mxu0 %v686
    %v688 = vpop.f32.mrb[0].mxu0
    %v689 = vadd.f32 %v594, %v688
    %v690 = vpop.f32.mrb[0].mxu0
    %691 = vdwg.mxu0
    %692 = vmatprep.subr.mxu0 0.0
    %v693 = vand.u32 %v585, 4294901760
    %v694 = vsub.f32 %v585, %v693
    %v695 = vand.u32 %v694, 4294901760
    %v696 = vsub.f32 %v694, %v695
    %v697 = vand.u32 %v696, 4294901760
    %698 = vmatpush1.msra.mxu0 %v697
    %699 = vmatprep.subr.mxu0 0.0
    %v700 = vand.u32 %v586, 4294901760
    %v701 = vsub.f32 %v586, %v700
    %v702 = vand.u32 %v701, 4294901760
    %v703 = vsub.f32 %v701, %v702
    %v704 = vand.u32 %v703, 4294901760
    %705 = vmatpush1.msra.mxu0 %v704
    %706 = vmatprep.subr.mxu0 0.0
    %v707 = vand.u32 %v587, 4294901760
    %v708 = vsub.f32 %v587, %v707
    %v709 = vand.u32 %v708, 4294901760
    %v710 = vsub.f32 %v708, %v709
    %v711 = vand.u32 %v710, 4294901760
    %712 = vmatpush1.msra.mxu0 %v711
    %713 = vmatprep.subr.mxu0 0.0
    %v714 = vand.u32 %v588, 4294901760
    %v715 = vsub.f32 %v588, %v714
    %v716 = vand.u32 %v715, 4294901760
    %v717 = vsub.f32 %v715, %v716
    %v718 = vand.u32 %v717, 4294901760
    %719 = vmatpush1.msra.mxu0 %v718
    %720 = vmatprep.subr.mxu0 0.0
    %721 = vmatpush1.msra.mxu0 0.0
    %722 = vmatprep.subr.mxu0 0.0
    %723 = vmatpush1.msra.mxu0 0.0
    %724 = vmatprep.subr.mxu0 0.0
    %725 = vmatpush1.msra.mxu0 0.0
    %726 = vmatprep.subr.mxu0 0.0
    %727 = vmatpush1.msra.mxu0 0.0
    %728 = vmatprep.subr.mxu0 0.0
    %729 = vmatpush1.msra.mxu0 0.0
    %730 = vmatprep.subr.mxu0 0.0
    %731 = vmatpush1.msra.mxu0 0.0
    %732 = vmatprep.subr.mxu0 0.0
    %733 = vmatpush1.msra.mxu0 0.0
    %734 = vmatprep.subr.mxu0 0.0
    %735 = vmatpush1.msra.mxu0 0.0
    %736 = vmatprep.subr.mxu0 0.0
    %737 = vmatpush1.msra.mxu0 0.0
    %738 = vmatprep.subr.mxu0 0.0
    %739 = vmatpush1.msra.mxu0 0.0
    %740 = vmatprep.subr.mxu0 0.0
    %741 = vmatpush1.msra.mxu0 0.0
    %742 = vmatprep.subr.mxu0 0.0
    %743 = vmatpush1.msra.mxu0 0.0
    %744 = vmatprep.subr.mxu0 0.0
    %745 = vmatpush1.msra.mxu0 0.0
    %746 = vmatprep.subr.mxu0 0.0
    %747 = vmatpush1.msra.mxu0 0.0
    %748 = vmatprep.subr.mxu0 0.0
    %749 = vmatpush1.msra.mxu0 0.0
    %750 = vmatprep.subr.mxu0 0.0
    %751 = vmatpush1.msra.mxu0 0.0
    %752 = vmatprep.subr.mxu0 0.0
    %753 = vmatpush1.msra.mxu0 0.0
    %754 = vmatprep.subr.mxu0 0.0
    %755 = vmatpush1.msra.mxu0 0.0
    %756 = vmatprep.subr.mxu0 0.0
    %757 = vmatpush1.msra.mxu0 0.0
    %758 = vmatprep.subr.mxu0 0.0
    %759 = vmatpush1.msra.mxu0 0.0
    %760 = vmatprep.subr.mxu0 0.0
    %761 = vmatpush1.msra.mxu0 0.0
    %762 = vmatprep.subr.mxu0 0.0
    %763 = vmatpush1.msra.mxu0 0.0
    %764 = vmatprep.subr.mxu0 0.0
    %765 = vmatpush1.msra.mxu0 0.0
    %766 = vmatprep.subr.mxu0 0.0
    %767 = vmatpush1.msra.mxu0 0.0
    %768 = vmatprep.subr.mxu0 0.0
    %769 = vmatpush1.msra.mxu0 0.0
    %770 = vmatprep.subr.mxu0 0.0
    %771 = vmatpush1.msra.mxu0 0.0
    %772 = vmatprep.subr.mxu0 0.0
    %773 = vmatpush1.msra.mxu0 0.0
    %774 = vmatprep.subr.mxu0 0.0
    %775 = vmatpush1.msra.mxu0 0.0
    %776 = vmatprep.mubr.f32.mxu0 0.0
    %v777 = vand.u32 %v598, 4294901760
    %778 = vmatmul.mubr.f32.gmra.mrb[0].mxu0 %v777
    %v779 = vpop.f32.mrb[0].mxu0
    %v780 = vadd.f32 %v679, %v779
    %v781 = vpop.f32.mrb[0].mxu0
    %782 = vmatprep.mubr.f32.mxu0 0.0
    %v783 = vand.u32 %v601, 4294901760
    %784 = vmatmul.mubr.f32.gmra.mrb[0].mxu0 %v783
    %v785 = vpop.f32.mrb[0].mxu0
    %v786 = vadd.f32 %v689, %v785
    %v787 = vpop.f32.mrb[0].mxu0
    %788 = vdwg.mxu0
    %789 = vmatprep.subr.mxu0 0.0
    %v790 = vand.u32 %v585, 4294901760
    %v791 = vsub.f32 %v585, %v790
    %792 = vmatpush1.msra.mxu0 %v791
    %793 = vmatprep.subr.mxu0 0.0
    %v794 = vand.u32 %v586, 4294901760
    %v795 = vsub.f32 %v586, %v794
    %796 = vmatpush1.msra.mxu0 %v795
    %797 = vmatprep.subr.mxu0 0.0
    %v798 = vand.u32 %v587, 4294901760
    %v799 = vsub.f32 %v587, %v798
    %800 = vmatpush1.msra.mxu0 %v799
    %801 = vmatprep.subr.mxu0 0.0
    %v802 = vand.u32 %v588, 4294901760
    %v803 = vsub.f32 %v588, %v802
    %804 = vmatpush1.msra.mxu0 %v803
    %805 = vmatprep.subr.mxu0 0.0
    %806 = vmatpush1.msra.mxu0 0.0
    %807 = vmatprep.subr.mxu0 0.0
    %808 = vmatpush1.msra.mxu0 0.0
    %809 = vmatprep.subr.mxu0 0.0
    %810 = vmatpush1.msra.mxu0 0.0
    %811 = vmatprep.subr.mxu0 0.0
    %812 = vmatpush1.msra.mxu0 0.0
    %813 = vmatprep.subr.mxu0 0.0
    %814 = vmatpush1.msra.mxu0 0.0
    %815 = vmatprep.subr.mxu0 0.0
    %816 = vmatpush1.msra.mxu0 0.0
    %817 = vmatprep.subr.mxu0 0.0
    %818 = vmatpush1.msra.mxu0 0.0
    %819 = vmatprep.subr.mxu0 0.0
    %820 = vmatpush1.msra.mxu0 0.0
    %821 = vmatprep.subr.mxu0 0.0
    %822 = vmatpush1.msra.mxu0 0.0
    %823 = vmatprep.subr.mxu0 0.0
    %824 = vmatpush1.msra.mxu0 0.0
    %825 = vmatprep.subr.mxu0 0.0
    %826 = vmatpush1.msra.mxu0 0.0
    %827 = vmatprep.subr.mxu0 0.0
    %828 = vmatpush1.msra.mxu0 0.0
    %829 = vmatprep.subr.mxu0 0.0
    %830 = vmatpush1.msra.mxu0 0.0
    %831 = vmatprep.subr.mxu0 0.0
    %832 = vmatpush1.msra.mxu0 0.0
    %833 = vmatprep.subr.mxu0 0.0
    %834 = vmatpush1.msra.mxu0 0.0
    %835 = vmatprep.subr.mxu0 0.0
    %836 = vmatpush1.msra.mxu0 0.0
    %837 = vmatprep.subr.mxu0 0.0
    %838 = vmatpush1.msra.mxu0 0.0
    %839 = vmatprep.subr.mxu0 0.0
    %840 = vmatpush1.msra.mxu0 0.0
    %841 = vmatprep.subr.mxu0 0.0
    %842 = vmatpush1.msra.mxu0 0.0
    %843 = vmatprep.subr.mxu0 0.0
    %844 = vmatpush1.msra.mxu0 0.0
    %845 = vmatprep.subr.mxu0 0.0
    %846 = vmatpush1.msra.mxu0 0.0
    %847 = vmatprep.subr.mxu0 0.0
    %848 = vmatpush1.msra.mxu0 0.0
    %849 = vmatprep.subr.mxu0 0.0
    %850 = vmatpush1.msra.mxu0 0.0
    %851 = vmatprep.subr.mxu0 0.0
    %852 = vmatpush1.msra.mxu0 0.0
    %853 = vmatprep.subr.mxu0 0.0
    %854 = vmatpush1.msra.mxu0 0.0
    %855 = vmatprep.subr.mxu0 0.0
    %856 = vmatpush1.msra.mxu0 0.0
    %857 = vmatprep.subr.mxu0 0.0
    %858 = vmatpush1.msra.mxu0 0.0
    %859 = vmatprep.subr.mxu0 0.0
    %860 = vmatpush1.msra.mxu0 0.0
    %861 = vmatprep.mubr.f32.mxu0 0.0
    %v862 = vand.u32 %v598, 4294901760
    %v863 = vsub.f32 %v598, %v862
    %864 = vmatmul.mubr.f32.gmra.mrb[0].mxu0 %v863
    %v865 = vpop.f32.mrb[0].mxu0
    %v866 = vadd.f32 %v780, %v865
    %v867 = vpop.f32.mrb[0].mxu0
    %868 = vmatprep.mubr.f32.mxu0 0.0
    %v869 = vand.u32 %v601, 4294901760
    %v870 = vsub.f32 %v601, %v869
    %871 = vmatmul.mubr.f32.gmra.mrb[0].mxu0 %v870
    %v872 = vpop.f32.mrb[0].mxu0
    %v873 = vadd.f32 %v786, %v872
    %v874 = vpop.f32.mrb[0].mxu0
    %875 = vdwg.mxu0
    %876 = vmatprep.subr.mxu0 0.0
    %v877 = vand.u32 %v585, 4294901760
    %878 = vmatpush1.msra.mxu0 %v877
    %879 = vmatprep.subr.mxu0 0.0
    %v880 = vand.u32 %v586, 4294901760
    %881 = vmatpush1.msra.mxu0 %v880
    %882 = vmatprep.subr.mxu0 0.0
    %v883 = vand.u32 %v587, 4294901760
    %884 = vmatpush1.msra.mxu0 %v883
    %885 = vmatprep.subr.mxu0 0.0
    %v886 = vand.u32 %v588, 4294901760
    %887 = vmatpush1.msra.mxu0 %v886
    %888 = vmatprep.subr.mxu0 0.0
    %889 = vmatpush1.msra.mxu0 0.0
    %890 = vmatprep.subr.mxu0 0.0
    %891 = vmatpush1.msra.mxu0 0.0
    %892 = vmatprep.subr.mxu0 0.0
    %893 = vmatpush1.msra.mxu0 0.0
    %894 = vmatprep.subr.mxu0 0.0
    %895 = vmatpush1.msra.mxu0 0.0
    %896 = vmatprep.subr.mxu0 0.0
    %897 = vmatpush1.msra.mxu0 0.0
    %898 = vmatprep.subr.mxu0 0.0
    %899 = vmatpush1.msra.mxu0 0.0
    %900 = vmatprep.subr.mxu0 0.0
    %901 = vmatpush1.msra.mxu0 0.0
    %902 = vmatprep.subr.mxu0 0.0
    %903 = vmatpush1.msra.mxu0 0.0
    %904 = vmatprep.subr.mxu0 0.0
    %905 = vmatpush1.msra.mxu0 0.0
    %906 = vmatprep.subr.mxu0 0.0
    %907 = vmatpush1.msra.mxu0 0.0
    %908 = vmatprep.subr.mxu0 0.0
    %909 = vmatpush1.msra.mxu0 0.0
    %910 = vmatprep.subr.mxu0 0.0
    %911 = vmatpush1.msra.mxu0 0.0
    %912 = vmatprep.subr.mxu0 0.0
    %913 = vmatpush1.msra.mxu0 0.0
    %914 = vmatprep.subr.mxu0 0.0
    %915 = vmatpush1.msra.mxu0 0.0
    %916 = vmatprep.subr.mxu0 0.0
    %917 = vmatpush1.msra.mxu0 0.0
    %918 = vmatprep.subr.mxu0 0.0
    %919 = vmatpush1.msra.mxu0 0.0
    %920 = vmatprep.subr.mxu0 0.0
    %921 = vmatpush1.msra.mxu0 0.0
    %922 = vmatprep.subr.mxu0 0.0
    %923 = vmatpush1.msra.mxu0 0.0
    %924 = vmatprep.subr.mxu0 0.0
    %925 = vmatpush1.msra.mxu0 0.0
    %926 = vmatprep.subr.mxu0 0.0
    %927 = vmatpush1.msra.mxu0 0.0
    %928 = vmatprep.subr.mxu0 0.0
    %929 = vmatpush1.msra.mxu0 0.0
    %930 = vmatprep.subr.mxu0 0.0
    %931 = vmatpush1.msra.mxu0 0.0
    %932 = vmatprep.subr.mxu0 0.0
    %933 = vmatpush1.msra.mxu0 0.0
    %934 = vmatprep.subr.mxu0 0.0
    %935 = vmatpush1.msra.mxu0 0.0
    %936 = vmatprep.subr.mxu0 0.0
    %937 = vmatpush1.msra.mxu0 0.0
    %938 = vmatprep.subr.mxu0 0.0
    %939 = vmatpush1.msra.mxu0 0.0
    %940 = vmatprep.subr.mxu0 0.0
    %941 = vmatpush1.msra.mxu0 0.0
    %942 = vmatprep.subr.mxu0 0.0
    %943 = vmatpush1.msra.mxu0 0.0
    %944 = vmatprep.mubr.f32.mxu0 0.0
    %v945 = vand.u32 %v598, 4294901760
    %v946 = vsub.f32 %v598, %v945
    %v947 = vand.u32 %v946, 4294901760
    %948 = vmatmul.mubr.f32.gmra.mrb[0].mxu0 %v947
    %v949 = vpop.f32.mrb[0].mxu0
    %v950 = vadd.f32 %v866, %v949
    %v951 = vpop.f32.mrb[0].mxu0
    %952 = vmatprep.mubr.f32.mxu0 0.0
    %v953 = vand.u32 %v601, 4294901760
    %v954 = vsub.f32 %v601, %v953
    %v955 = vand.u32 %v954, 4294901760
    %956 = vmatmul.mubr.f32.gmra.mrb[0].mxu0 %v955
    %v957 = vpop.f32.mrb[0].mxu0
    %v958 = vadd.f32 %v873, %v957
    %v959 = vpop.f32.mrb[0].mxu0
    %960 = vdwg.mxu0
    %961 = vmatprep.subr.mxu0 0.0
    %v962 = vand.u32 %v585, 4294901760
    %v963 = vsub.f32 %v585, %v962
    %v964 = vand.u32 %v963, 4294901760
    %965 = vmatpush1.msra.mxu0 %v964
    %966 = vmatprep.subr.mxu0 0.0
    %v967 = vand.u32 %v586, 4294901760
    %v968 = vsub.f32 %v586, %v967
    %v969 = vand.u32 %v968, 4294901760
    %970 = vmatpush1.msra.mxu0 %v969
    %971 = vmatprep.subr.mxu0 0.0
    %v972 = vand.u32 %v587, 4294901760
    %v973 = vsub.f32 %v587, %v972
    %v974 = vand.u32 %v973, 4294901760
    %975 = vmatpush1.msra.mxu0 %v974
    %976 = vmatprep.subr.mxu0 0.0
    %v977 = vand.u32 %v588, 4294901760
    %v978 = vsub.f32 %v588, %v977
    %v979 = vand.u32 %v978, 4294901760
    %980 = vmatpush1.msra.mxu0 %v979
    %981 = vmatprep.subr.mxu0 0.0
    %982 = vmatpush1.msra.mxu0 0.0
    %983 = vmatprep.subr.mxu0 0.0
    %984 = vmatpush1.msra.mxu0 0.0
    %985 = vmatprep.subr.mxu0 0.0
    %986 = vmatpush1.msra.mxu0 0.0
    %987 = vmatprep.subr.mxu0 0.0
    %988 = vmatpush1.msra.mxu0 0.0
    %989 = vmatprep.subr.mxu0 0.0
    %990 = vmatpush1.msra.mxu0 0.0
    %991 = vmatprep.subr.mxu0 0.0
    %992 = vmatpush1.msra.mxu0 0.0
    %993 = vmatprep.subr.mxu0 0.0
    %994 = vmatpush1.msra.mxu0 0.0
    %995 = vmatprep.subr.mxu0 0.0
    %996 = vmatpush1.msra.mxu0 0.0
    %997 = vmatprep.subr.mxu0 0.0
    %998 = vmatpush1.msra.mxu0 0.0
    %999 = vmatprep.subr.mxu0 0.0
    %1000 = vmatpush1.msra.mxu0 0.0
    %1001 = vmatprep.subr.mxu0 0.0
    %1002 = vmatpush1.msra.mxu0 0.0
    %1003 = vmatprep.subr.mxu0 0.0
    %1004 = vmatpush1.msra.mxu0 0.0
    %1005 = vmatprep.subr.mxu0 0.0
    %1006 = vmatpush1.msra.mxu0 0.0
    %1007 = vmatprep.subr.mxu0 0.0
    %1008 = vmatpush1.msra.mxu0 0.0
    %1009 = vmatprep.subr.mxu0 0.0
    %1010 = vmatpush1.msra.mxu0 0.0
    %1011 = vmatprep.subr.mxu0 0.0
    %1012 = vmatpush1.msra.mxu0 0.0
    %1013 = vmatprep.subr.mxu0 0.0
    %1014 = vmatpush1.msra.mxu0 0.0
    %1015 = vmatprep.subr.mxu0 0.0
    %1016 = vmatpush1.msra.mxu0 0.0
    %1017 = vmatprep.subr.mxu0 0.0
    %1018 = vmatpush1.msra.mxu0 0.0
    %1019 = vmatprep.subr.mxu0 0.0
    %1020 = vmatpush1.msra.mxu0 0.0
    %1021 = vmatprep.subr.mxu0 0.0
    %1022 = vmatpush1.msra.mxu0 0.0
    %1023 = vmatprep.subr.mxu0 0.0
    %1024 = vmatpush1.msra.mxu0 0.0
    %1025 = vmatprep.subr.mxu0 0.0
    %1026 = vmatpush1.msra.mxu0 0.0
    %1027 = vmatprep.subr.mxu0 0.0
    %1028 = vmatpush1.msra.mxu0 0.0
    %1029 = vmatprep.subr.mxu0 0.0
    %1030 = vmatpush1.msra.mxu0 0.0
    %1031 = vmatprep.subr.mxu0 0.0
    %1032 = vmatpush1.msra.mxu0 0.0
    %1033 = vmatprep.subr.mxu0 0.0
    %1034 = vmatpush1.msra.mxu0 0.0
    %1035 = vmatprep.subr.mxu0 0.0
    %1036 = vmatpush1.msra.mxu0 0.0
    %1037 = vmatprep.mubr.f32.mxu0 0.0
    %v1038 = vand.u32 %v598, 4294901760
    %1039 = vmatmul.mubr.f32.gmra.mrb[0].mxu0 %v1038
    %v1040 = vpop.f32.mrb[0].mxu0
    %v1041 = vadd.f32 %v950, %v1040
    %v1042 = vpop.f32.mrb[0].mxu0
    %1043 = vmatprep.mubr.f32.mxu0 0.0
    %v1044 = vand.u32 %v601, 4294901760
    %1045 = vmatmul.mubr.f32.gmra.mrb[0].mxu0 %v1044
    %v1046 = vpop.f32.mrb[0].mxu0
    %v1047 = vadd.f32 %v958, %v1046
    %v1048 = vpop.f32.mrb[0].mxu0
    %1049 = vdwg.mxu0
    %1050 = vmatprep.subr.mxu0 0.0
    %v1051 = vand.u32 %v585, 4294901760
    %1052 = vmatpush1.msra.mxu0 %v1051
    %1053 = vmatprep.subr.mxu0 0.0
    %v1054 = vand.u32 %v586, 4294901760
    %1055 = vmatpush1.msra.mxu0 %v1054
    %1056 = vmatprep.subr.mxu0 0.0
    %v1057 = vand.u32 %v587, 4294901760
    %1058 = vmatpush1.msra.mxu0 %v1057
    %1059 = vmatprep.subr.mxu0 0.0
    %v1060 = vand.u32 %v588, 4294901760
    %1061 = vmatpush1.msra.mxu0 %v1060
    %1062 = vmatprep.subr.mxu0 0.0
    %1063 = vmatpush1.msra.mxu0 0.0
    %1064 = vmatprep.subr.mxu0 0.0
    %1065 = vmatpush1.msra.mxu0 0.0
    %1066 = vmatprep.subr.mxu0 0.0
    %1067 = vmatpush1.msra.mxu0 0.0
    %1068 = vmatprep.subr.mxu0 0.0
    %1069 = vmatpush1.msra.mxu0 0.0
    %1070 = vmatprep.subr.mxu0 0.0
    %1071 = vmatpush1.msra.mxu0 0.0
    %1072 = vmatprep.subr.mxu0 0.0
    %1073 = vmatpush1.msra.mxu0 0.0
    %1074 = vmatprep.subr.mxu0 0.0
    %1075 = vmatpush1.msra.mxu0 0.0
    %1076 = vmatprep.subr.mxu0 0.0
    %1077 = vmatpush1.msra.mxu0 0.0
    %1078 = vmatprep.subr.mxu0 0.0
    %1079 = vmatpush1.msra.mxu0 0.0
    %1080 = vmatprep.subr.mxu0 0.0
    %1081 = vmatpush1.msra.mxu0 0.0
    %1082 = vmatprep.subr.mxu0 0.0
    %1083 = vmatpush1.msra.mxu0 0.0
    %1084 = vmatprep.subr.mxu0 0.0
    %1085 = vmatpush1.msra.mxu0 0.0
    %1086 = vmatprep.subr.mxu0 0.0
    %1087 = vmatpush1.msra.mxu0 0.0
    %1088 = vmatprep.subr.mxu0 0.0
    %1089 = vmatpush1.msra.mxu0 0.0
    %1090 = vmatprep.subr.mxu0 0.0
    %1091 = vmatpush1.msra.mxu0 0.0
    %1092 = vmatprep.subr.mxu0 0.0
    %1093 = vmatpush1.msra.mxu0 0.0
    %1094 = vmatprep.subr.mxu0 0.0
    %1095 = vmatpush1.msra.mxu0 0.0
    %1096 = vmatprep.subr.mxu0 0.0
    %1097 = vmatpush1.msra.mxu0 0.0
    %1098 = vmatprep.subr.mxu0 0.0
    %1099 = vmatpush1.msra.mxu0 0.0
    %1100 = vmatprep.subr.mxu0 0.0
    %1101 = vmatpush1.msra.mxu0 0.0
    %1102 = vmatprep.subr.mxu0 0.0
    %1103 = vmatpush1.msra.mxu0 0.0
    %1104 = vmatprep.subr.mxu0 0.0
    %1105 = vmatpush1.msra.mxu0 0.0
    %1106 = vmatprep.subr.mxu0 0.0
    %1107 = vmatpush1.msra.mxu0 0.0
    %1108 = vmatprep.subr.mxu0 0.0
    %1109 = vmatpush1.msra.mxu0 0.0
    %1110 = vmatprep.subr.mxu0 0.0
    %1111 = vmatpush1.msra.mxu0 0.0
    %1112 = vmatprep.subr.mxu0 0.0
    %1113 = vmatpush1.msra.mxu0 0.0
    %1114 = vmatprep.subr.mxu0 0.0
    %1115 = vmatpush1.msra.mxu0 0.0
    %1116 = vmatprep.subr.mxu0 0.0
    %1117 = vmatpush1.msra.mxu0 0.0
    %1118 = vmatprep.mubr.f32.mxu0 0.0
    %v1119 = vand.u32 %v598, 4294901760
    %1120 = vmatmul.mubr.f32.gmra.mrb[0].mxu0 %v1119
    %v1121 = vpop.f32.mrb[0].mxu0
    %v1122 = vadd.f32 %v1041, %v1121
    %v1123 = vpop.f32.mrb[0].mxu0
    %1124 = vmatprep.mubr.f32.mxu0 0.0
    %v1125 = vand.u32 %v601, 4294901760
    %1126 = vmatmul.mubr.f32.gmra.mrb[0].mxu0 %v1125
    %v1127 = vpop.f32.mrb[0].mxu0
    %v1128 = vadd.f32 %v1047, %v1127
    %v1129 = vpop.f32.mrb[0].mxu0
    %1130 = vdwg.mxu0
    %v1131 = vmax.f32 %v1122, 0.0
    %v1132 = vmax.f32 %v1128, 0.0
    %v1133 = vld [vmem:[%s6] sm:$0x1]
    %v1135 = vlaneseq
    %v1136 = vshrl.u32 %v1135, 7
    %v1137 = vsub.s32 0, %v1136
    %v1138 = vrot.slane %v1133, %v1137
    %v1140 = vmul.f32 %v1131, %v1138
    %v1141 = vmul.f32 %v1132, %v1138
    %v1142 = vsel %vm596, %v1140, 0.0
    %1143 = vadd.xlane.f32.xlu0 %v1142
    %v1144 = vpop.xlane.xlu0 %1143
    %v1145 = vsel %vm596, %v1141, 0.0
    %1146 = vadd.xlane.f32.xlu0 %v1145
    %v1147 = vpop.xlane.xlu0 %1146
    %v1148 = vld [vmem:[#allocation3] sm:$0x1]
    %v1150 = vlaneseq
    %v1151 = vshrl.u32 %v1150, 7
    %v1152 = vsub.s32 0, %v1151
    %v1153 = vrot.slane %v1148, %v1152
    %v1155 = vadd.f32 %v1144, %v1153
    %v1156 = vadd.f32 %v1147, %v1153
    %vm1157 = vcmask 7168
    %1158 = vst.msk [vmem:[%s8] sm:$0xff] %vm1157, %v1155
    %1159 = vst.msk [vmem:[%s8 + $0x8] sm:$0xff] %vm1157, %v1156
    // Predicated region
    $region38: #{soft_q_forward.1} parent=1 // pred_check
      _
    $region39: #{soft_q_forward.1} parent=1 // pred_check_branch
      %1161 = sbr.rel (0) target = $region41
    $region40: #{soft_q_forward.1} parent=1 // pred_region
      _
    $region41: #{soft_q_forward.1} parent=1 // pred_fallthru
      _
    // Predicated region
    $region42: #{soft_q_forward.1} parent=1 // pred_check
      _
    $region43: #{soft_q_forward.1} parent=1 // pred_check_branch
      %1163 = sbr.rel (0) target = $region45
    $region44: #{soft_q_forward.1} parent=1 // pred_region
      _
    $region45: #{soft_q_forward.1} parent=1 // pred_fallthru
      _
    %1164 = vsyncpa [#allocation5], 1

</llo_original>
